<compile_context>
chip_gen: v6e
topology: v6e:2x2x1
jax: 0.10.0
libtpu: 0.0.40
codegen_flags: <defaults>
</compile_context>

<pallas_src>
import functools
import math

import jax
import jax.numpy as jnp
from jax.experimental import pallas as pl
from jax.experimental.pallas import tpu as pltpu

BN_EPS = 1e-5


# --------------------------------------------------------------------------- #
# Hardware-aware helpers
# --------------------------------------------------------------------------- #
def _round_up(x, m):
    return (x + m - 1) // m * m


def _vmem_capacity_bytes():
    try:
        return int(pltpu.get_tpu_info().vmem_capacity_bytes)
    except Exception:
        return 64 * 1024 * 1024  # conservative fallback (v7x-sized)


def _contraction_pad_multiple():
    # v6e/v7x MXU passes are 256 deep in K (2x256^2); K=128 half-fills each pass.
    # v5e (4x128^2) is saturated at 128, so don't waste FLOPs there.
    try:
        kind = jax.devices()[0].device_kind.lower()
        if "v6" in kind or "v7" in kind:
            return 256
    except Exception:
        pass
    return 128


def _compiler_params(vmem_bytes_needed, dimension_semantics=None):
    cap = _vmem_capacity_bytes()
    lim = int(min(int(0.9 * cap), max(int(vmem_bytes_needed), 1 << 20)))
    kwargs = dict(vmem_limit_bytes=lim)
    if dimension_semantics is not None:
        kwargs["dimension_semantics"] = dimension_semantics
    return pltpu.CompilerParams(**kwargs)


# --------------------------------------------------------------------------- #
# Kernels
# --------------------------------------------------------------------------- #
def _gcn_fused_kernel(*refs, num_layers):
    """Whole stack in one call, everything resident in VMEM (small-N path).

      refs = (a, x, w_0..w_{L-1}, b_0..b_{L-1}, out)
      a  : [Np, Np]           bf16  normalized adjacency (padded, lane-dense)
      x  : [Np, C0p]          bf16  node features
      w_l: [C_lp, C_{l+1}p]   bf16  BN-folded weights (per-layer padding)
      b_l: [1,  C_{l+1}p]     f32   BN-folded biases
      out: [Np, CLp]          f32
    """
    a_ref, x_ref = refs[0], refs[1]
    w_refs = refs[2:2 + num_layers]
    b_refs = refs[2 + num_layers:2 + 2 * num_layers]
    out_ref = refs[-1]

    h = x_ref[...]                                   # [Np, C0p] bf16
    for l in range(num_layers):                      # static unroll (L is small)
        xw = jnp.dot(h, w_refs[l][...], preferred_element_type=jnp.float32)
        # A_hat indexed per layer (bounded live range across the unroll).
        y = jnp.dot(a_ref[...], xw.astype(jnp.bfloat16),
                    preferred_element_type=jnp.float32) + b_refs[l][...]
        if l < num_layers - 1:
            # BN already folded into (w, b); ReLU; dropout is eval-mode no-op.
            h = jnp.maximum(y, 0.0).astype(jnp.bfloat16)
        else:
            out_ref[...] = y.astype(out_ref.dtype)


def _xw_kernel(h_ref, w_ref, o_ref):
    """Row-tiled XW: [tm, Cin] @ [Cin, Cout] -> [tm, Cout] (bf16 out, f32 acc)."""
    o_ref[...] = jnp.dot(h_ref[...], w_ref[...],
                         preferred_element_type=jnp.float32).astype(o_ref.dtype)


def _aggregate_kernel(a_ref, xw_ref, b_ref, o_ref, *, relu):
    """Row-streamed aggregation: [tm, Np] @ [Np, Cout] + b (+ ReLU)."""
    y = jnp.dot(a_ref[...], xw_ref[...],
                preferred_element_type=jnp.float32) + b_ref[...]
    if relu:
        y = jnp.maximum(y, 0.0)
    o_ref[...] = y.astype(o_ref.dtype)


# --------------------------------------------------------------------------- #
# Adjacency normalization, param init, BN folding + padding
# --------------------------------------------------------------------------- #
def build_normalized_adjacency(edge_index, edge_weight, num_nodes):
    """Dense D^{-1/2} (A + I) D^{-1/2}; A[t, s] += w for each edge s->t."""
    src, tgt = edge_index[0], edge_index[1]
    if edge_weight is None:
        edge_weight = jnp.ones(src.shape[0], dtype=jnp.float32)
    a = jnp.zeros((num_nodes, num_nodes), dtype=jnp.float32)
    a = a.at[tgt, src].add(edge_weight)
    loop = jnp.arange(num_nodes)
    a = a.at[loop, loop].add(1.0)                     # self loops
    deg = a.sum(axis=1)
    d_inv_sqrt = jnp.where(deg > 0, jax.lax.rsqrt(deg), 0.0)
    return d_inv_sqrt[:, None] * a * d_inv_sqrt[None, :]


def init_gcn_params(key, in_channels, hidden_channels, out_channels, num_layers):
    """Glorot-uniform weights, zero bias, NON-trivial BN stats (exercises folding)."""
    dims = [in_channels] + [hidden_channels] * (num_layers - 1) + [out_channels]
    params = []
    for i in range(num_layers):
        c_in, c_out = dims[i], dims[i + 1]
        key, kw, km, kv, kg, kb = jax.random.split(key, 6)
        limit = math.sqrt(6.0 / (c_in + c_out))
        w = jax.random.uniform(kw, (c_in, c_out), jnp.float32, -limit, limit)
        b = jnp.zeros((1, c_out), jnp.float32)
        gamma = jax.random.uniform(kg, (1, c_out), jnp.float32, 0.5, 1.5)
        beta = 0.1 * jax.random.normal(kb, (1, c_out), jnp.float32)
        mean = 0.1 * jax.random.normal(km, (1, c_out), jnp.float32)
        var = jax.random.uniform(kv, (1, c_out), jnp.float32, 0.5, 1.5)
        params.append(dict(w=w, b=b, gamma=gamma, beta=beta, mean=mean, var=var))
    return params


def _prepare_operands(params, x, edge_index, edge_weight, use_bn):
    n, c_in = x.shape
    L = len(params)
    dims = [c_in] + [p["w"].shape[1] for p in params]

    kmult = _contraction_pad_multiple()
    pad_dims = []
    for i, d in enumerate(dims):
        # dims[0..L-1] are contraction dims of some W_l; final out dim only needs 128.
        mult = kmult if (i < len(dims) - 1 and d > 128) else 128
        pad_dims.append(_round_up(d, mult))

    n_pad = _round_up(max(n, 1), 128)                 # lane-dense A, full MXU K

    a_hat = build_normalized_adjacency(edge_index, edge_weight, n)
    a_p = jnp.zeros((n_pad, n_pad), jnp.bfloat16).at[:n, :n].set(
        a_hat.astype(jnp.bfloat16))
    x_p = jnp.zeros((n_pad, pad_dims[0]), jnp.bfloat16).at[:n, :c_in].set(
        x.astype(jnp.bfloat16))

    # Fold eval-mode BN + bias into (W', b') per hidden layer; per-layer padding.
    w_ps, b_ps = [], []
    for i, p in enumerate(params):
        w, b = p["w"], p["b"]
        if use_bn and i < L - 1:
            s = p["gamma"] * jax.lax.rsqrt(p["var"] + BN_EPS)   # [1, c_out]
            w_f = w * s                                          # scale commutes with A_hat @ (.)
            b_f = (b - p["mean"]) * s + p["beta"]
        else:
            w_f, b_f = w, b
        cin, cout = w.shape
        wp = jnp.zeros((pad_dims[i], pad_dims[i + 1]), jnp.bfloat16)
        wp = wp.at[:cin, :cout].set(w_f.astype(jnp.bfloat16))
        bp = jnp.zeros((1, pad_dims[i + 1]), jnp.float32).at[:, :cout].set(
            b_f.astype(jnp.float32))
        w_ps.append(wp)
        b_ps.append(bp)
    return a_p, x_p, w_ps, b_ps, n, n_pad, pad_dims


# --------------------------------------------------------------------------- #
# Forward paths
# --------------------------------------------------------------------------- #
def _fused_footprint_bytes(a_p, x_p, w_ps, b_ps, n_pad, pad_dims):
    return (a_p.size * 2 + x_p.size * 2
            + sum(w.size * 2 for w in w_ps) + sum(b.size * 4 for b in b_ps)
            + n_pad * pad_dims[-1] * 4              # f32 output
            + 2 * n_pad * max(pad_dims) * 4)        # f32 intermediates headroom


def _fused_forward(a_p, x_p, w_ps, b_ps, n_pad, pad_dims):
    L = len(w_ps)
    vmem = pl.BlockSpec(memory_space=pltpu.MemorySpace.VMEM)
    flops = sum(2 * n_pad * pad_dims[l] * pad_dims[l + 1]
                + 2 * n_pad * n_pad * pad_dims[l + 1] for l in range(L))
    footprint = _fused_footprint_bytes(a_p, x_p, w_ps, b_ps, n_pad, pad_dims)
    kernel = functools.partial(_gcn_fused_kernel, num_layers=L)
    return pl.pallas_call(
        kernel,
        out_shape=jax.ShapeDtypeStruct((n_pad, pad_dims[-1]), jnp.float32),
        in_specs=[vmem] * (2 + 2 * L),
        out_specs=vmem,
        compiler_params=_compiler_params(footprint * 3 // 2 + (2 << 20)),
        cost_estimate=pl.CostEstimate(flops=flops, transcendentals=0,
                                      bytes_accessed=footprint),
    )(a_p, x_p, *w_ps, *b_ps)


def _streamed_layer(a_p, h_p, w_p, b_p, *, relu, tm, out_dtype):
    """One GCN layer with A_hat streamed in row blocks (parallel grid)."""
    n_pad = a_p.shape[0]
    cin_pad, cout_pad = w_p.shape
    grid = (n_pad // tm,)

    # Stage 1: xw = h @ W'   (row-tiled, parallel over both TCs on v7x)
    xw_bytes = (2 * tm * cin_pad * 2 + 2 * cin_pad * cout_pad * 2
                + 2 * tm * cout_pad * 2) + (1 << 20)
    xw = pl.pallas_call(
        _xw_kernel,
        out_shape=jax.ShapeDtypeStruct((n_pad, cout_pad), jnp.bfloat16),
        grid=grid,
        in_specs=[pl.BlockSpec((tm, cin_pad), lambda i: (i, 0)),
                  pl.BlockSpec((cin_pad, cout_pad), lambda i: (0, 0))],
        out_specs=pl.BlockSpec((tm, cout_pad), lambda i: (i, 0)),
        compiler_params=_compiler_params(xw_bytes, ("parallel",)),
    )(h_p, w_p)

    # Stage 2: y = A_row_block @ xw + b' (+ ReLU); A row blocks auto double-buffered.
    out_itemsize = jnp.dtype(out_dtype).itemsize
    agg_bytes = (2 * tm * n_pad * 2 + 2 * n_pad * cout_pad * 2
                 + 2 * cout_pad * 4 + 2 * tm * cout_pad * out_itemsize) + (1 << 20)
    y = pl.pallas_call(
        functools.partial(_aggregate_kernel, relu=relu),
        out_shape=jax.ShapeDtypeStruct((n_pad, cout_pad), out_dtype),
        grid=grid,
        in_specs=[pl.BlockSpec((tm, n_pad), lambda i: (i, 0)),
                  pl.BlockSpec((n_pad, cout_pad), lambda i: (0, 0)),
                  pl.BlockSpec((1, cout_pad), lambda i: (0, 0))],
        out_specs=pl.BlockSpec((tm, cout_pad), lambda i: (i, 0)),
        compiler_params=_compiler_params(agg_bytes, ("parallel",)),
    )(a_p, xw, b_p)
    return y


def gcn_forward(params, x, edge_index, edge_weight=None, *, use_bn=True,
                path="auto"):
    c_out_final = params[-1]["w"].shape[1]
    a_p, x_p, w_ps, b_ps, n, n_pad, pad_dims = _prepare_operands(
        params, x, edge_index, edge_weight, use_bn)
    L = len(params)

    if path == "auto":
        # Generation-aware gate: fused fully-resident path only if it fits the
        # chip's VMEM with headroom (64 MiB on v7x vs 128 MiB on v5e/v6e).
        cap = _vmem_capacity_bytes()
        footprint = _fused_footprint_bytes(a_p, x_p, w_ps, b_ps, n_pad, pad_dims)
        path = "fused" if footprint <= int(0.7 * cap) else "streamed"

    if path == "fused":
        out_p = _fused_forward(a_p, x_p, w_ps, b_ps, n_pad, pad_dims)
    else:
        tm = 256 if n_pad % 256 == 0 else 128
        h = x_p
        for l in range(L):
            last = l == L - 1
            h = _streamed_layer(a_p, h, w_ps[l], b_ps[l],
                                relu=not last, tm=tm,
                                out_dtype=jnp.float32 if last else jnp.bfloat16)
        out_p = h

    return out_p[:n, :c_out_final]


# --------------------------------------------------------------------------- #
# Pure-JAX reference (f32) for correctness check.
# --------------------------------------------------------------------------- #
def gcn_reference(params, x, edge_index, edge_weight=None, *, use_bn=True):
    n = x.shape[0]
    a_hat = build_normalized_adjacency(edge_index, edge_weight, n)
    h = x
    num_layers = len(params)
    for i in range(num_layers - 1):
        p = params[i]
        h = a_hat @ (h @ p["w"]) + p["b"]
        if use_bn:
            h = (h - p["mean"]) * jax.lax.rsqrt(p["var"] + BN_EPS) * p["gamma"] + p["beta"]
        h = jnp.maximum(h, 0.0)
    p = params[-1]
    return a_hat @ (h @ p["w"]) + p["b"]


if __name__ == "__main__":
    key = jax.random.PRNGKey(0)
    k_x1, k_e1, k_p1, k_x2, k_e2, k_p2 = jax.random.split(key, 6)

    # ---- test 1: toy graph, auto path (fused fully-resident kernel) ----
    n1, cin1, hid1, cout1, L1, e1 = 32, 16, 32, 8, 3, 64
    x1 = jax.random.normal(k_x1, (n1, cin1), jnp.float32)
    ei1 = jax.random.randint(k_e1, (2, e1), 0, n1, dtype=jnp.int32)
    p1 = init_gcn_params(k_p1, cin1, hid1, cout1, L1)

    out1 = jax.block_until_ready(gcn_forward(p1, x1, ei1, use_bn=True, path="auto"))
    ref1 = gcn_reference(p1, x1, ei1, use_bn=True)
    assert out1.shape == (n1, cout1)
    assert jnp.all(jnp.isfinite(out1))
    # bf16 MXU operands -> allow ~1e-1 drift vs f32 reference
    assert jnp.allclose(out1, ref1, atol=1e-1, rtol=1e-1), float(jnp.abs(out1 - ref1).max())

    # ---- test 2: larger graph, forced streamed path (row-tiled parallel grid) ----
    n2, cin2, hid2, cout2, L2, e2 = 300, 48, 64, 10, 3, 1200
    x2 = jax.random.normal(k_x2, (n2, cin2), jnp.float32)
    ei2 = jax.random.randint(k_e2, (2, e2), 0, n2, dtype=jnp.int32)
    p2 = init_gcn_params(k_p2, cin2, hid2, cout2, L2)

    out2 = jax.block_until_ready(gcn_forward(p2, x2, ei2, use_bn=True, path="streamed"))
    ref2 = gcn_reference(p2, x2, ei2, use_bn=True)
    assert out2.shape == (n2, cout2)
    assert jnp.all(jnp.isfinite(out2))
    assert jnp.allclose(out2, ref2, atol=1e-1, rtol=1e-1), float(jnp.abs(out2 - ref2).max())

    print("KERNEL_OK")
</pallas_src>

<mosaic_0001>
module attributes {stable_mosaic.version = 11 : i64} {
  func.func @_gcn_fused_kernel(%arg0: memref<128x128xbf16, #tpu.memory_space<vmem>>, %arg1: memref<128x128xbf16, #tpu.memory_space<vmem>>, %arg2: memref<128x128xbf16, #tpu.memory_space<vmem>>, %arg3: memref<128x128xbf16, #tpu.memory_space<vmem>>, %arg4: memref<128x128xbf16, #tpu.memory_space<vmem>>, %arg5: memref<1x128xf32, #tpu.memory_space<vmem>>, %arg6: memref<1x128xf32, #tpu.memory_space<vmem>>, %arg7: memref<1x128xf32, #tpu.memory_space<vmem>>, %arg8: memref<128x128xf32, #tpu.memory_space<vmem>>) attributes {dimension_semantics = [], scalar_prefetch = 0 : i64, scratch_operands = 0 : i64, tpu.core_type = #tpu.core_type<tc>} {
    %c0 = arith.constant 0 : index
    %c0_0 = arith.constant 0 : index
    %0 = vector.load %arg1[%c0, %c0_0] : memref<128x128xbf16, #tpu.memory_space<vmem>>, vector<128x128xbf16>
    %c0_1 = arith.constant 0 : index
    %c0_2 = arith.constant 0 : index
    %1 = vector.load %arg2[%c0_1, %c0_2] : memref<128x128xbf16, #tpu.memory_space<vmem>>, vector<128x128xbf16>
    %cst = arith.constant dense<0.000000e+00> : vector<128x128xf32>
    %2 = tpu.matmul %0, %1, %cst {dimension_numbers = #tpu.dot_dimension_numbers<[1], [0], [0], [1], [0, 0, 1, 1], [], []>} : vector<128x128xbf16>, vector<128x128xbf16>, vector<128x128xf32> -> vector<128x128xf32>
    %c0_3 = arith.constant 0 : index
    %c0_4 = arith.constant 0 : index
    %3 = vector.load %arg0[%c0_3, %c0_4] : memref<128x128xbf16, #tpu.memory_space<vmem>>, vector<128x128xbf16>
    %4 = arith.truncf %2 : vector<128x128xf32> to vector<128x128xbf16>
    %cst_5 = arith.constant dense<0.000000e+00> : vector<128x128xf32>
    %5 = tpu.matmul %3, %4, %cst_5 {dimension_numbers = #tpu.dot_dimension_numbers<[1], [0], [0], [1], [0, 0, 1, 1], [], []>} : vector<128x128xbf16>, vector<128x128xbf16>, vector<128x128xf32> -> vector<128x128xf32>
    %c0_6 = arith.constant 0 : index
    %c0_7 = arith.constant 0 : index
    %6 = vector.load %arg5[%c0_6, %c0_7] : memref<1x128xf32, #tpu.memory_space<vmem>>, vector<1x128xf32>
    %7 = vector.broadcast %6 : vector<1x128xf32> to vector<128x128xf32>
    %8 = arith.addf %5, %7 : vector<128x128xf32>
    %cst_8 = arith.constant 0.000000e+00 : f32
    %9 = vector.broadcast %cst_8 : f32 to vector<128x128xf32>
    %10 = arith.maximumf %8, %9 : vector<128x128xf32>
    %11 = arith.truncf %10 : vector<128x128xf32> to vector<128x128xbf16>
    %c0_9 = arith.constant 0 : index
    %c0_10 = arith.constant 0 : index
    %12 = vector.load %arg3[%c0_9, %c0_10] : memref<128x128xbf16, #tpu.memory_space<vmem>>, vector<128x128xbf16>
    %cst_11 = arith.constant dense<0.000000e+00> : vector<128x128xf32>
    %13 = tpu.matmul %11, %12, %cst_11 {dimension_numbers = #tpu.dot_dimension_numbers<[1], [0], [0], [1], [0, 0, 1, 1], [], []>} : vector<128x128xbf16>, vector<128x128xbf16>, vector<128x128xf32> -> vector<128x128xf32>
    %c0_12 = arith.constant 0 : index
    %c0_13 = arith.constant 0 : index
    %14 = vector.load %arg0[%c0_12, %c0_13] : memref<128x128xbf16, #tpu.memory_space<vmem>>, vector<128x128xbf16>
    %15 = arith.truncf %13 : vector<128x128xf32> to vector<128x128xbf16>
    %cst_14 = arith.constant dense<0.000000e+00> : vector<128x128xf32>
    %16 = tpu.matmul %14, %15, %cst_14 {dimension_numbers = #tpu.dot_dimension_numbers<[1], [0], [0], [1], [0, 0, 1, 1], [], []>} : vector<128x128xbf16>, vector<128x128xbf16>, vector<128x128xf32> -> vector<128x128xf32>
    %c0_15 = arith.constant 0 : index
    %c0_16 = arith.constant 0 : index
    %17 = vector.load %arg6[%c0_15, %c0_16] : memref<1x128xf32, #tpu.memory_space<vmem>>, vector<1x128xf32>
    %18 = vector.broadcast %17 : vector<1x128xf32> to vector<128x128xf32>
    %19 = arith.addf %16, %18 : vector<128x128xf32>
    %cst_17 = arith.constant 0.000000e+00 : f32
    %20 = vector.broadcast %cst_17 : f32 to vector<128x128xf32>
    %21 = arith.maximumf %19, %20 : vector<128x128xf32>
    %22 = arith.truncf %21 : vector<128x128xf32> to vector<128x128xbf16>
    %c0_18 = arith.constant 0 : index
    %c0_19 = arith.constant 0 : index
    %23 = vector.load %arg4[%c0_18, %c0_19] : memref<128x128xbf16, #tpu.memory_space<vmem>>, vector<128x128xbf16>
    %cst_20 = arith.constant dense<0.000000e+00> : vector<128x128xf32>
    %24 = tpu.matmul %22, %23, %cst_20 {dimension_numbers = #tpu.dot_dimension_numbers<[1], [0], [0], [1], [0, 0, 1, 1], [], []>} : vector<128x128xbf16>, vector<128x128xbf16>, vector<128x128xf32> -> vector<128x128xf32>
    %c0_21 = arith.constant 0 : index
    %c0_22 = arith.constant 0 : index
    %25 = vector.load %arg0[%c0_21, %c0_22] : memref<128x128xbf16, #tpu.memory_space<vmem>>, vector<128x128xbf16>
    %26 = arith.truncf %24 : vector<128x128xf32> to vector<128x128xbf16>
    %cst_23 = arith.constant dense<0.000000e+00> : vector<128x128xf32>
    %27 = tpu.matmul %25, %26, %cst_23 {dimension_numbers = #tpu.dot_dimension_numbers<[1], [0], [0], [1], [0, 0, 1, 1], [], []>} : vector<128x128xbf16>, vector<128x128xbf16>, vector<128x128xf32> -> vector<128x128xf32>
    %c0_24 = arith.constant 0 : index
    %c0_25 = arith.constant 0 : index
    %28 = vector.load %arg7[%c0_24, %c0_25] : memref<1x128xf32, #tpu.memory_space<vmem>>, vector<1x128xf32>
    %29 = vector.broadcast %28 : vector<1x128xf32> to vector<128x128xf32>
    %30 = arith.addf %27, %29 : vector<128x128xf32>
    %c0_26 = arith.constant 0 : index
    %c0_27 = arith.constant 0 : index
    %31 = vector.load %arg8[%c0_26, %c0_27] : memref<128x128xf32, #tpu.memory_space<vmem>>, vector<128x128xf32>
    tpu.vector_store %arg8[%c0_26, %c0_27], %30 {strides = array<i32>} : memref<128x128xf32, #tpu.memory_space<vmem>>, vector<128x128xf32>,
    return
  }
}

</mosaic_0001>

<llo_original>
// kernel: tpu_custom_call.1
$region0: #{tpu_custom_call.1}
  #allocation0 [shape = 'u32[]', space=smem, size = 0x4, offset = 0x4, fixed_abs, tag = 'smem constant byte address 0x4 - core index']
  #allocation1 [shape = 'u32[144,128]{1,0:T(1,128)}', space=vmem, size = 0x12000, scoped, tag = 'internal scratch']
  %s0 = inlined_call_operand.hbm [shape: bf16[128,128], index: 0, kind: input, shape index: {}]
  %s1 = inlined_call_operand.hbm [shape: bf16[128,128], index: 1, kind: input, shape index: {}]
  %s2 = inlined_call_operand.hbm [shape: bf16[128,128], index: 2, kind: input, shape index: {}]
  %s3 = inlined_call_operand.hbm [shape: bf16[128,128], index: 3, kind: input, shape index: {}]
  %s4 = inlined_call_operand.hbm [shape: bf16[128,128], index: 4, kind: input, shape index: {}]
  %s5 = inlined_call_operand.vmem [shape: f32[1,128], index: 5, kind: input, shape index: {}]
  %s6 = inlined_call_operand.vmem [shape: f32[1,128], index: 6, kind: input, shape index: {}]
  %s7 = inlined_call_operand.vmem [shape: f32[1,128], index: 7, kind: input, shape index: {}]
  %s8 = inlined_call_operand.hbm [shape: f32[128,128], index: 8, kind: output, shape index: {}]
  %s9 = sld [smem:[#allocation0]]
  $region62: #{tpu_custom_call.1} parent=0
    _
  %s11 = ssub.s32 1, %s9
  %s12 = scalar_select 0, %s11, %s9
  $region1: #{tpu_custom_call.1} parent=0
    #allocation2 [shape = 'u8[32768]{0}', space=vmem, size = 0x8000, scoped, tag = 'input window, operand 0, single buffered']
    #allocation3 [shape = 's32[1]{0}', space=sflag, size = 0x4, scoped, tag = 'scoped memory for tpu_custom_call.1']
    #allocation4 [shape = 's32[1]{0}', space=sflag, size = 0x4, scoped, tag = 'scoped memory for tpu_custom_call.1']
    #allocation5 [shape = 'u8[32768]{0}', space=vmem, size = 0x8000, scoped, tag = 'input window, operand 1, single buffered']
    #allocation6 [shape = 's32[1]{0}', space=sflag, size = 0x4, scoped, tag = 'scoped memory for tpu_custom_call.1']
    #allocation7 [shape = 'u8[32768]{0}', space=vmem, size = 0x8000, scoped, tag = 'input window, operand 2, single buffered']
    #allocation8 [shape = 'u8[32768]{0}', space=vmem, size = 0x8000, scoped, tag = 'input window, operand 3, single buffered']
    #allocation9 [shape = 's32[1]{0}', space=sflag, size = 0x4, scoped, tag = 'scoped memory for tpu_custom_call.1']
    #allocation10 [shape = 'u8[32768]{0}', space=vmem, size = 0x8000, scoped, tag = 'input window, operand 4, single buffered']
    #allocation11 [shape = 'u8[65536]{0}', space=vmem, size = 0x10000, scoped, tag = 'output window, operand 0, single buffered']
    %13 = vsyncpa [#allocation3], 0
    %14 = vsyncpa [#allocation6], 0
    %15 = vsyncpa [#allocation9], 0
    %16 = vsyncpa [#allocation4], 0
    // Predicated region
    $region2: #{tpu_custom_call.1} parent=1 // pred_check
      _
    $region3: #{tpu_custom_call.1} parent=1 // pred_check_branch
      %18 = sbr.rel (0) target = $region5
    $region4: #{tpu_custom_call.1} parent=1 // pred_region
      %s20 = ssub.s32 1024, 1024
      %21 = vsyncadd [#allocation3], %s20
      %s22 = sshll.u32 [#allocation2], 4
      %s23 = int_to_ptr.vmem [resolvable:$true] %s22
      %28 = dma.hbm_to_vmem [thread:$0]  %s0, 1024, %s23, [#allocation3], 64, 64, 4
    $region5: #{tpu_custom_call.1} parent=1 // pred_fallthru
      _
    // Predicated region
    $region6: #{tpu_custom_call.1} parent=1 // pred_check
      _
    $region7: #{tpu_custom_call.1} parent=1 // pred_check_branch
      %30 = sbr.rel (0) target = $region9
    $region8: #{tpu_custom_call.1} parent=1 // pred_region
      %s32 = ssub.s32 1024, 1024
      %33 = vsyncadd [#allocation6], %s32
      %s34 = sshll.u32 [#allocation5], 4
      %s35 = int_to_ptr.vmem [resolvable:$true] %s34
      %40 = dma.hbm_to_vmem [thread:$0]  %s1, 1024, %s35, [#allocation6], 64, 64, 4
    $region9: #{tpu_custom_call.1} parent=1 // pred_fallthru
      _
    // Predicated region
    $region10: #{tpu_custom_call.1} parent=1 // pred_check
      _
    $region11: #{tpu_custom_call.1} parent=1 // pred_check_branch
      %42 = sbr.rel (0) target = $region13
    $region12: #{tpu_custom_call.1} parent=1 // pred_region
      %s44 = ssub.s32 1024, 1024
      %45 = vsyncadd [#allocation6], %s44
      %s46 = sshll.u32 [#allocation7], 4
      %s47 = int_to_ptr.vmem [resolvable:$true] %s46
      %52 = dma.hbm_to_vmem [thread:$0]  %s2, 1024, %s47, [#allocation6], 64, 64, 4
    $region13: #{tpu_custom_call.1} parent=1 // pred_fallthru
      _
    // Predicated region
    $region14: #{tpu_custom_call.1} parent=1 // pred_check
      _
    $region15: #{tpu_custom_call.1} parent=1 // pred_check_branch
      %54 = sbr.rel (0) target = $region17
    $region16: #{tpu_custom_call.1} parent=1 // pred_region
      %s56 = ssub.s32 1024, 1024
      %57 = vsyncadd [#allocation9], %s56
      %s58 = sshll.u32 [#allocation8], 4
      %s59 = int_to_ptr.vmem [resolvable:$true] %s58
      %64 = dma.hbm_to_vmem [thread:$0]  %s3, 1024, %s59, [#allocation9], 64, 64, 4
    $region17: #{tpu_custom_call.1} parent=1 // pred_fallthru
      _
    // Predicated region
    $region18: #{tpu_custom_call.1} parent=1 // pred_check
      _
    $region19: #{tpu_custom_call.1} parent=1 // pred_check_branch
      %66 = sbr.rel (0) target = $region21
    $region20: #{tpu_custom_call.1} parent=1 // pred_region
      %s68 = ssub.s32 1024, 1024
      %69 = vsyncadd [#allocation9], %s68
      %s70 = sshll.u32 [#allocation10], 4
      %s71 = int_to_ptr.vmem [resolvable:$true] %s70
      %76 = dma.hbm_to_vmem [thread:$0]  %s4, 1024, %s71, [#allocation9], 64, 64, 4
    $region21: #{tpu_custom_call.1} parent=1 // pred_fallthru
      _
    // Predicated region
    $region22: #{tpu_custom_call.1} parent=1 // pred_check
      _
    $region23: #{tpu_custom_call.1} parent=1 // pred_check_branch
      %78 = sbr.rel (0) target = $region25
    $region24: #{tpu_custom_call.1} parent=1 // pred_region
      _
    $region25: #{tpu_custom_call.1} parent=1 // pred_fallthru
      _
    // Predicated region
    $region26: #{tpu_custom_call.1} parent=1 // pred_check
      _
    $region27: #{tpu_custom_call.1} parent=1 // pred_check_branch
      %80 = sbr.rel (0) target = $region29
    $region28: #{tpu_custom_call.1} parent=1 // pred_region
      _
    $region29: #{tpu_custom_call.1} parent=1 // pred_fallthru
      _
    // Predicated region
    $region30: #{tpu_custom_call.1} parent=1 // pred_check
      _
    $region31: #{tpu_custom_call.1} parent=1 // pred_check_branch
      %82 = sbr.rel (0) target = $region33
    $region32: #{tpu_custom_call.1} parent=1 // pred_region
      _
    $region33: #{tpu_custom_call.1} parent=1 // pred_fallthru
      _
    // Predicated region
    $region34: #{tpu_custom_call.1} parent=1 // pred_check
      _
    $region35: #{tpu_custom_call.1} parent=1 // pred_check_branch
      %84 = sbr.rel (0) target = $region37
    $region36: #{tpu_custom_call.1} parent=1 // pred_region
      %85 = dma.done [#allocation3], 1024
    $region37: #{tpu_custom_call.1} parent=1 // pred_fallthru
      _
    // Predicated region
    $region38: #{tpu_custom_call.1} parent=1 // pred_check
      _
    $region39: #{tpu_custom_call.1} parent=1 // pred_check_branch
      %87 = sbr.rel (0) target = $region41
    $region40: #{tpu_custom_call.1} parent=1 // pred_region
      %88 = dma.done [#allocation6], 1024
    $region41: #{tpu_custom_call.1} parent=1 // pred_fallthru
      _
    // Predicated region
    $region42: #{tpu_custom_call.1} parent=1 // pred_check
      _
    $region43: #{tpu_custom_call.1} parent=1 // pred_check_branch
      %90 = sbr.rel (0) target = $region45
    $region44: #{tpu_custom_call.1} parent=1 // pred_region
      %91 = dma.done [#allocation6], 1024
    $region45: #{tpu_custom_call.1} parent=1 // pred_fallthru
      _
    // Predicated region
    $region46: #{tpu_custom_call.1} parent=1 // pred_check
      _
    $region47: #{tpu_custom_call.1} parent=1 // pred_check_branch
      %93 = sbr.rel (0) target = $region49
    $region48: #{tpu_custom_call.1} parent=1 // pred_region
      %94 = dma.done [#allocation9], 1024
    $region49: #{tpu_custom_call.1} parent=1 // pred_fallthru
      _
    // Predicated region
    $region50: #{tpu_custom_call.1} parent=1 // pred_check
      _
    $region51: #{tpu_custom_call.1} parent=1 // pred_check_branch
      %96 = sbr.rel (0) target = $region53
    $region52: #{tpu_custom_call.1} parent=1 // pred_region
      %97 = dma.done [#allocation9], 1024
    $region53: #{tpu_custom_call.1} parent=1 // pred_fallthru
      _
    %v99 = vld [vmem:[#allocation5] sm:$0xf]
    %v100 = vld [vmem:[#allocation5 + $0x4] sm:$0xf]
    %v101 = vld [vmem:[#allocation5 + $0x8] sm:$0xf]
    %v102 = vld [vmem:[#allocation5 + $0xc] sm:$0xf]
    %v103 = vld [vmem:[#allocation5 + $0x10] sm:$0xf]
    %v104 = vld [vmem:[#allocation5 + $0x14] sm:$0xf]
    %v105 = vld [vmem:[#allocation5 + $0x18] sm:$0xf]
    %v106 = vld [vmem:[#allocation5 + $0x1c] sm:$0xf]
    %v107 = vld [vmem:[#allocation5 + $0x20] sm:$0xf]
    %v108 = vld [vmem:[#allocation5 + $0x24] sm:$0xf]
    %v109 = vld [vmem:[#allocation5 + $0x28] sm:$0xf]
    %v110 = vld [vmem:[#allocation5 + $0x2c] sm:$0xf]
    %v111 = vld [vmem:[#allocation5 + $0x30] sm:$0xf]
    %v112 = vld [vmem:[#allocation5 + $0x34] sm:$0xf]
    %v113 = vld [vmem:[#allocation5 + $0x38] sm:$0xf]
    %v114 = vld [vmem:[#allocation5 + $0x3c] sm:$0xf]
    %v115 = vld [vmem:[#allocation7] sm:$0xf]
    %v116 = vld [vmem:[#allocation7 + $0x4] sm:$0xf]
    %v117 = vld [vmem:[#allocation7 + $0x8] sm:$0xf]
    %v118 = vld [vmem:[#allocation7 + $0xc] sm:$0xf]
    %v119 = vld [vmem:[#allocation7 + $0x10] sm:$0xf]
    %v120 = vld [vmem:[#allocation7 + $0x14] sm:$0xf]
    %v121 = vld [vmem:[#allocation7 + $0x18] sm:$0xf]
    %v122 = vld [vmem:[#allocation7 + $0x1c] sm:$0xf]
    %v123 = vld [vmem:[#allocation7 + $0x20] sm:$0xf]
    %v124 = vld [vmem:[#allocation7 + $0x24] sm:$0xf]
    %v125 = vld [vmem:[#allocation7 + $0x28] sm:$0xf]
    %v126 = vld [vmem:[#allocation7 + $0x2c] sm:$0xf]
    %v127 = vld [vmem:[#allocation7 + $0x30] sm:$0xf]
    %v128 = vld [vmem:[#allocation7 + $0x34] sm:$0xf]
    %v129 = vld [vmem:[#allocation7 + $0x38] sm:$0xf]
    %v130 = vld [vmem:[#allocation7 + $0x3c] sm:$0xf]
    %v147 = vunpack.c.l.b16 %v99
    %v148 = vunpack.c.l.b16 %v100
    %v149 = vunpack.c.l.b16 %v101
    %v150 = vunpack.c.l.b16 %v102
    %v151 = vunpack.c.l.b16 %v103
    %v152 = vunpack.c.l.b16 %v104
    %v153 = vunpack.c.l.b16 %v105
    %v154 = vunpack.c.l.b16 %v106
    %v155 = vunpack.c.l.b16 %v107
    %v156 = vunpack.c.l.b16 %v108
    %v157 = vunpack.c.l.b16 %v109
    %v158 = vunpack.c.l.b16 %v110
    %v159 = vunpack.c.l.b16 %v111
    %v160 = vunpack.c.l.b16 %v112
    %v161 = vunpack.c.l.b16 %v113
    %v162 = vunpack.c.l.b16 %v114
    %v163 = vpack.c.b16 %v148, %v147
    %v164 = vpack.c.b16 %v150, %v149
    %v165 = vpack.c.b16 %v152, %v151
    %v166 = vpack.c.b16 %v154, %v153
    %v167 = vpack.c.b16 %v156, %v155
    %v168 = vpack.c.b16 %v158, %v157
    %v169 = vpack.c.b16 %v160, %v159
    %v170 = vpack.c.b16 %v162, %v161
    %v195 = vunpack.c.l.b16 %v115
    %v196 = vunpack.c.l.b16 %v116
    %v197 = vunpack.c.l.b16 %v117
    %v198 = vunpack.c.l.b16 %v118
    %v199 = vunpack.c.l.b16 %v119
    %v200 = vunpack.c.l.b16 %v120
    %v201 = vunpack.c.l.b16 %v121
    %v202 = vunpack.c.l.b16 %v122
    %v203 = vunpack.c.l.b16 %v123
    %v204 = vunpack.c.l.b16 %v124
    %v205 = vunpack.c.l.b16 %v125
    %v206 = vunpack.c.l.b16 %v126
    %v207 = vunpack.c.l.b16 %v127
    %v208 = vunpack.c.l.b16 %v128
    %v209 = vunpack.c.l.b16 %v129
    %v210 = vunpack.c.l.b16 %v130
    %v211 = vpack.c.b16 %v196, %v195
    %v212 = vpack.c.b16 %v198, %v197
    %v213 = vpack.c.b16 %v200, %v199
    %v214 = vpack.c.b16 %v202, %v201
    %v215 = vpack.c.b16 %v204, %v203
    %v216 = vpack.c.b16 %v206, %v205
    %v217 = vpack.c.b16 %v208, %v207
    %v218 = vpack.c.b16 %v210, %v209
    %227 = vmatprep.subr.bf16.mxu0 0
    %228 = vmatpush1.bf16.msra.mxu0 %v218
    %229 = vmatprep.subr.bf16.mxu0 0
    %230 = vmatpush1.bf16.msra.mxu0 %v217
    %231 = vmatprep.subr.bf16.mxu0 0
    %232 = vmatpush1.bf16.msra.mxu0 %v216
    %233 = vmatprep.subr.bf16.mxu0 0
    %234 = vmatpush1.bf16.msra.mxu0 %v215
    %235 = vmatprep.subr.bf16.mxu0 0
    %236 = vmatpush1.bf16.msra.mxu0 %v214
    %237 = vmatprep.subr.bf16.mxu0 0
    %238 = vmatpush1.bf16.msra.mxu0 %v213
    %239 = vmatprep.subr.bf16.mxu0 0
    %240 = vmatpush1.bf16.msra.mxu0 %v212
    %241 = vmatprep.subr.bf16.mxu0 0
    %242 = vmatpush1.bf16.msra.mxu0 %v211
    %243 = vmatprep.subr.bf16.mxu0 0
    %244 = vmatpush2.bf16.msra.mxu0 0
    %245 = vmatprep.subr.bf16.mxu0 0
    %246 = vmatpush2.bf16.msra.mxu0 0
    %247 = vmatprep.subr.bf16.mxu0 0
    %248 = vmatpush2.bf16.msra.mxu0 0
    %249 = vmatprep.subr.bf16.mxu0 0
    %250 = vmatpush2.bf16.msra.mxu0 0
    %251 = vmatprep.subr.bf16.mxu0 0
    %252 = vmatpush2.bf16.msra.mxu0 0
    %253 = vmatprep.subr.bf16.mxu0 0
    %254 = vmatpush2.bf16.msra.mxu0 0
    %255 = vmatprep.subr.bf16.mxu0 0
    %256 = vmatpush2.bf16.msra.mxu0 0
    %257 = vmatprep.subr.bf16.mxu0 0
    %258 = vmatpush2.bf16.msra.mxu0 0
    %259 = vmatprep.mubr.bf16.mxu0 0
    %260 = vmatmul.mubr.bf16.gmra.mxu0 %v163
    %v261 = vpop.f32.mrf.mxu0
    %v262 = vadd.f32 0.0, %v261
    %v263 = vpop.f32.mrf.mxu0
    %v264 = vpop.f32.mrf.mxu0
    %v265 = vadd.f32 0.0, %v264
    %v266 = vpop.f32.mrf.mxu0
    %267 = vmatprep.mubr.bf16.mxu0 0
    %268 = vmatmul.mubr.bf16.gmra.mxu0 %v164
    %v269 = vpop.f32.mrf.mxu0
    %v270 = vadd.f32 0.0, %v269
    %v271 = vpop.f32.mrf.mxu0
    %v272 = vpop.f32.mrf.mxu0
    %v273 = vadd.f32 0.0, %v272
    %v274 = vpop.f32.mrf.mxu0
    %275 = vmatprep.mubr.bf16.mxu0 0
    %276 = vmatmul.mubr.bf16.gmra.mxu0 %v165
    %v277 = vpop.f32.mrf.mxu0
    %v278 = vadd.f32 0.0, %v277
    %v279 = vpop.f32.mrf.mxu0
    %v280 = vpop.f32.mrf.mxu0
    %v281 = vadd.f32 0.0, %v280
    %v282 = vpop.f32.mrf.mxu0
    %283 = vmatprep.mubr.bf16.mxu0 0
    %284 = vmatmul.mubr.bf16.gmra.mxu0 %v166
    %v285 = vpop.f32.mrf.mxu0
    %v286 = vadd.f32 0.0, %v285
    %v287 = vpop.f32.mrf.mxu0
    %v288 = vpop.f32.mrf.mxu0
    %v289 = vadd.f32 0.0, %v288
    %v290 = vpop.f32.mrf.mxu0
    %291 = vmatprep.mubr.bf16.mxu0 0
    %292 = vmatmul.mubr.bf16.gmra.mxu0 %v167
    %v293 = vpop.f32.mrf.mxu0
    %v294 = vadd.f32 0.0, %v293
    %v295 = vpop.f32.mrf.mxu0
    %v296 = vpop.f32.mrf.mxu0
    %v297 = vadd.f32 0.0, %v296
    %v298 = vpop.f32.mrf.mxu0
    %299 = vmatprep.mubr.bf16.mxu0 0
    %300 = vmatmul.mubr.bf16.gmra.mxu0 %v168
    %v301 = vpop.f32.mrf.mxu0
    %v302 = vadd.f32 0.0, %v301
    %v303 = vpop.f32.mrf.mxu0
    %v304 = vpop.f32.mrf.mxu0
    %v305 = vadd.f32 0.0, %v304
    %v306 = vpop.f32.mrf.mxu0
    %307 = vmatprep.mubr.bf16.mxu0 0
    %308 = vmatmul.mubr.bf16.gmra.mxu0 %v169
    %v309 = vpop.f32.mrf.mxu0
    %v310 = vadd.f32 0.0, %v309
    %v311 = vpop.f32.mrf.mxu0
    %v312 = vpop.f32.mrf.mxu0
    %v313 = vadd.f32 0.0, %v312
    %v314 = vpop.f32.mrf.mxu0
    %315 = vmatprep.mubr.bf16.mxu0 0
    %316 = vmatmul.mubr.bf16.gmra.mxu0 %v170
    %v317 = vpop.f32.mrf.mxu0
    %v318 = vadd.f32 0.0, %v317
    %v319 = vpop.f32.mrf.mxu0
    %v320 = vpop.f32.mrf.mxu0
    %v321 = vadd.f32 0.0, %v320
    %v322 = vpop.f32.mrf.mxu0
    %323 = vdwg.mxu0
    %v324 = vld [vmem:[#allocation2] sm:$0xf]
    %v325 = vld [vmem:[#allocation2 + $0x4] sm:$0xf]
    %v326 = vld [vmem:[#allocation2 + $0x8] sm:$0xf]
    %v327 = vld [vmem:[#allocation2 + $0xc] sm:$0xf]
    %v328 = vld [vmem:[#allocation2 + $0x10] sm:$0xf]
    %v329 = vld [vmem:[#allocation2 + $0x14] sm:$0xf]
    %v330 = vld [vmem:[#allocation2 + $0x18] sm:$0xf]
    %v331 = vld [vmem:[#allocation2 + $0x1c] sm:$0xf]
    %v332 = vld [vmem:[#allocation2 + $0x20] sm:$0xf]
    %v333 = vld [vmem:[#allocation2 + $0x24] sm:$0xf]
    %v334 = vld [vmem:[#allocation2 + $0x28] sm:$0xf]
    %v335 = vld [vmem:[#allocation2 + $0x2c] sm:$0xf]
    %v336 = vld [vmem:[#allocation2 + $0x30] sm:$0xf]
    %v337 = vld [vmem:[#allocation2 + $0x34] sm:$0xf]
    %v338 = vld [vmem:[#allocation2 + $0x38] sm:$0xf]
    %v339 = vld [vmem:[#allocation2 + $0x3c] sm:$0xf]
    %v340 = vpack.c.bf16 %v265, %v262
    %v341 = vpack.c.bf16 %v273, %v270
    %v342 = vpack.c.bf16 %v281, %v278
    %v343 = vpack.c.bf16 %v289, %v286
    %v344 = vpack.c.bf16 %v297, %v294
    %v345 = vpack.c.bf16 %v305, %v302
    %v346 = vpack.c.bf16 %v313, %v310
    %v347 = vpack.c.bf16 %v321, %v318
    %v348 = vld [vmem:[%s5] sm:$0x1]
    %v350 = vlaneseq
    %v351 = vshrl.u32 %v350, 7
    %v352 = vsub.s32 0, %v351
    %v353 = vrot.slane %v348, %v352
    %v371 = vunpack.c.l.b16 %v324
    %v372 = vunpack.c.l.b16 %v325
    %v373 = vunpack.c.l.b16 %v326
    %v374 = vunpack.c.l.b16 %v327
    %v375 = vunpack.c.l.b16 %v328
    %v376 = vunpack.c.l.b16 %v329
    %v377 = vunpack.c.l.b16 %v330
    %v378 = vunpack.c.l.b16 %v331
    %v379 = vunpack.c.l.b16 %v332
    %v380 = vunpack.c.l.b16 %v333
    %v381 = vunpack.c.l.b16 %v334
    %v382 = vunpack.c.l.b16 %v335
    %v383 = vunpack.c.l.b16 %v336
    %v384 = vunpack.c.l.b16 %v337
    %v385 = vunpack.c.l.b16 %v338
    %v386 = vunpack.c.l.b16 %v339
    %v387 = vpack.c.b16 %v372, %v371
    %v388 = vpack.c.b16 %v374, %v373
    %v389 = vpack.c.b16 %v376, %v375
    %v390 = vpack.c.b16 %v378, %v377
    %v391 = vpack.c.b16 %v380, %v379
    %v392 = vpack.c.b16 %v382, %v381
    %v393 = vpack.c.b16 %v384, %v383
    %v394 = vpack.c.b16 %v386, %v385
    %403 = vmatprep.subr.bf16.mxu0 0
    %404 = vmatpush1.bf16.msra.mxu0 %v347
    %405 = vmatprep.subr.bf16.mxu0 0
    %406 = vmatpush1.bf16.msra.mxu0 %v346
    %407 = vmatprep.subr.bf16.mxu0 0
    %408 = vmatpush1.bf16.msra.mxu0 %v345
    %409 = vmatprep.subr.bf16.mxu0 0
    %410 = vmatpush1.bf16.msra.mxu0 %v344
    %411 = vmatprep.subr.bf16.mxu0 0
    %412 = vmatpush1.bf16.msra.mxu0 %v343
    %413 = vmatprep.subr.bf16.mxu0 0
    %414 = vmatpush1.bf16.msra.mxu0 %v342
    %415 = vmatprep.subr.bf16.mxu0 0
    %416 = vmatpush1.bf16.msra.mxu0 %v341
    %417 = vmatprep.subr.bf16.mxu0 0
    %418 = vmatpush1.bf16.msra.mxu0 %v340
    %419 = vmatprep.subr.bf16.mxu0 0
    %420 = vmatpush2.bf16.msra.mxu0 0
    %421 = vmatprep.subr.bf16.mxu0 0
    %422 = vmatpush2.bf16.msra.mxu0 0
    %423 = vmatprep.subr.bf16.mxu0 0
    %424 = vmatpush2.bf16.msra.mxu0 0
    %425 = vmatprep.subr.bf16.mxu0 0
    %426 = vmatpush2.bf16.msra.mxu0 0
    %427 = vmatprep.subr.bf16.mxu0 0
    %428 = vmatpush2.bf16.msra.mxu0 0
    %429 = vmatprep.subr.bf16.mxu0 0
    %430 = vmatpush2.bf16.msra.mxu0 0
    %431 = vmatprep.subr.bf16.mxu0 0
    %432 = vmatpush2.bf16.msra.mxu0 0
    %433 = vmatprep.subr.bf16.mxu0 0
    %434 = vmatpush2.bf16.msra.mxu0 0
    %435 = vmatprep.mubr.bf16.mxu0 0
    %436 = vmatmul.mubr.bf16.gmra.mxu0 %v387
    %v437 = vpop.f32.mrf.mxu0
    %v438 = vadd.f32 %v353, %v437
    %v439 = vpop.f32.mrf.mxu0
    %v440 = vpop.f32.mrf.mxu0
    %v441 = vadd.f32 %v353, %v440
    %v442 = vpop.f32.mrf.mxu0
    %443 = vmatprep.mubr.bf16.mxu0 0
    %444 = vmatmul.mubr.bf16.gmra.mxu0 %v388
    %v445 = vpop.f32.mrf.mxu0
    %v446 = vadd.f32 %v353, %v445
    %v447 = vpop.f32.mrf.mxu0
    %v448 = vpop.f32.mrf.mxu0
    %v449 = vadd.f32 %v353, %v448
    %v450 = vpop.f32.mrf.mxu0
    %451 = vmatprep.mubr.bf16.mxu0 0
    %452 = vmatmul.mubr.bf16.gmra.mxu0 %v389
    %v453 = vpop.f32.mrf.mxu0
    %v454 = vadd.f32 %v353, %v453
    %v455 = vpop.f32.mrf.mxu0
    %v456 = vpop.f32.mrf.mxu0
    %v457 = vadd.f32 %v353, %v456
    %v458 = vpop.f32.mrf.mxu0
    %459 = vmatprep.mubr.bf16.mxu0 0
    %460 = vmatmul.mubr.bf16.gmra.mxu0 %v390
    %v461 = vpop.f32.mrf.mxu0
    %v462 = vadd.f32 %v353, %v461
    %v463 = vpop.f32.mrf.mxu0
    %v464 = vpop.f32.mrf.mxu0
    %v465 = vadd.f32 %v353, %v464
    %v466 = vpop.f32.mrf.mxu0
    %467 = vmatprep.mubr.bf16.mxu0 0
    %468 = vmatmul.mubr.bf16.gmra.mxu0 %v391
    %v469 = vpop.f32.mrf.mxu0
    %v470 = vadd.f32 %v353, %v469
    %v471 = vpop.f32.mrf.mxu0
    %v472 = vpop.f32.mrf.mxu0
    %v473 = vadd.f32 %v353, %v472
    %v474 = vpop.f32.mrf.mxu0
    %475 = vmatprep.mubr.bf16.mxu0 0
    %476 = vmatmul.mubr.bf16.gmra.mxu0 %v392
    %v477 = vpop.f32.mrf.mxu0
    %v478 = vadd.f32 %v353, %v477
    %v479 = vpop.f32.mrf.mxu0
    %v480 = vpop.f32.mrf.mxu0
    %v481 = vadd.f32 %v353, %v480
    %v482 = vpop.f32.mrf.mxu0
    %483 = vmatprep.mubr.bf16.mxu0 0
    %484 = vmatmul.mubr.bf16.gmra.mxu0 %v393
    %v485 = vpop.f32.mrf.mxu0
    %v486 = vadd.f32 %v353, %v485
    %v487 = vpop.f32.mrf.mxu0
    %v488 = vpop.f32.mrf.mxu0
    %v489 = vadd.f32 %v353, %v488
    %v490 = vpop.f32.mrf.mxu0
    %491 = vmatprep.mubr.bf16.mxu0 0
    %492 = vmatmul.mubr.bf16.gmra.mxu0 %v394
    %v493 = vpop.f32.mrf.mxu0
    %v494 = vadd.f32 %v353, %v493
    %v495 = vpop.f32.mrf.mxu0
    %v496 = vpop.f32.mrf.mxu0
    %v497 = vadd.f32 %v353, %v496
    %v498 = vpop.f32.mrf.mxu0
    %499 = vdwg.mxu0
    %v500 = vmax.f32 %v438, 0.0
    %v501 = vmax.f32 %v441, 0.0
    %v502 = vmax.f32 %v446, 0.0
    %v503 = vmax.f32 %v449, 0.0
    %v504 = vmax.f32 %v454, 0.0
    %v505 = vmax.f32 %v457, 0.0
    %v506 = vmax.f32 %v462, 0.0
    %v507 = vmax.f32 %v465, 0.0
    %v508 = vmax.f32 %v470, 0.0
    %v509 = vmax.f32 %v473, 0.0
    %v510 = vmax.f32 %v478, 0.0
    %v511 = vmax.f32 %v481, 0.0
    %v512 = vmax.f32 %v486, 0.0
    %v513 = vmax.f32 %v489, 0.0
    %v514 = vmax.f32 %v494, 0.0
    %v515 = vmax.f32 %v497, 0.0
    %v516 = vpack.c.bf16 %v501, %v500
    %v517 = vpack.c.bf16 %v503, %v502
    %v518 = vpack.c.bf16 %v505, %v504
    %v519 = vpack.c.bf16 %v507, %v506
    %v520 = vpack.c.bf16 %v509, %v508
    %v521 = vpack.c.bf16 %v511, %v510
    %v522 = vpack.c.bf16 %v513, %v512
    %v523 = vpack.c.bf16 %v515, %v514
    %v524 = vld [vmem:[#allocation8] sm:$0xf]
    %v525 = vld [vmem:[#allocation8 + $0x4] sm:$0xf]
    %v526 = vld [vmem:[#allocation8 + $0x8] sm:$0xf]
    %v527 = vld [vmem:[#allocation8 + $0xc] sm:$0xf]
    %v528 = vld [vmem:[#allocation8 + $0x10] sm:$0xf]
    %v529 = vld [vmem:[#allocation8 + $0x14] sm:$0xf]
    %v530 = vld [vmem:[#allocation8 + $0x18] sm:$0xf]
    %v531 = vld [vmem:[#allocation8 + $0x1c] sm:$0xf]
    %v532 = vld [vmem:[#allocation8 + $0x20] sm:$0xf]
    %v533 = vld [vmem:[#allocation8 + $0x24] sm:$0xf]
    %v534 = vld [vmem:[#allocation8 + $0x28] sm:$0xf]
    %v535 = vld [vmem:[#allocation8 + $0x2c] sm:$0xf]
    %v536 = vld [vmem:[#allocation8 + $0x30] sm:$0xf]
    %v537 = vld [vmem:[#allocation8 + $0x34] sm:$0xf]
    %v538 = vld [vmem:[#allocation8 + $0x38] sm:$0xf]
    %v539 = vld [vmem:[#allocation8 + $0x3c] sm:$0xf]
    %v556 = vunpack.c.l.b16 %v524
    %v557 = vunpack.c.l.b16 %v525
    %v558 = vunpack.c.l.b16 %v526
    %v559 = vunpack.c.l.b16 %v527
    %v560 = vunpack.c.l.b16 %v528
    %v561 = vunpack.c.l.b16 %v529
    %v562 = vunpack.c.l.b16 %v530
    %v563 = vunpack.c.l.b16 %v531
    %v564 = vunpack.c.l.b16 %v532
    %v565 = vunpack.c.l.b16 %v533
    %v566 = vunpack.c.l.b16 %v534
    %v567 = vunpack.c.l.b16 %v535
    %v568 = vunpack.c.l.b16 %v536
    %v569 = vunpack.c.l.b16 %v537
    %v570 = vunpack.c.l.b16 %v538
    %v571 = vunpack.c.l.b16 %v539
    %v572 = vpack.c.b16 %v557, %v556
    %v573 = vpack.c.b16 %v559, %v558
    %v574 = vpack.c.b16 %v561, %v560
    %v575 = vpack.c.b16 %v563, %v562
    %v576 = vpack.c.b16 %v565, %v564
    %v577 = vpack.c.b16 %v567, %v566
    %v578 = vpack.c.b16 %v569, %v568
    %v579 = vpack.c.b16 %v571, %v570
    %588 = vmatprep.subr.bf16.mxu0 0
    %589 = vmatpush1.bf16.msra.mxu0 %v579
    %590 = vmatprep.subr.bf16.mxu0 0
    %591 = vmatpush1.bf16.msra.mxu0 %v578
    %592 = vmatprep.subr.bf16.mxu0 0
    %593 = vmatpush1.bf16.msra.mxu0 %v577
    %594 = vmatprep.subr.bf16.mxu0 0
    %595 = vmatpush1.bf16.msra.mxu0 %v576
    %596 = vmatprep.subr.bf16.mxu0 0
    %597 = vmatpush1.bf16.msra.mxu0 %v575
    %598 = vmatprep.subr.bf16.mxu0 0
    %599 = vmatpush1.bf16.msra.mxu0 %v574
    %600 = vmatprep.subr.bf16.mxu0 0
    %601 = vmatpush1.bf16.msra.mxu0 %v573
    %602 = vmatprep.subr.bf16.mxu0 0
    %603 = vmatpush1.bf16.msra.mxu0 %v572
    %604 = vmatprep.subr.bf16.mxu0 0
    %605 = vmatpush2.bf16.msra.mxu0 0
    %606 = vmatprep.subr.bf16.mxu0 0
    %607 = vmatpush2.bf16.msra.mxu0 0
    %608 = vmatprep.subr.bf16.mxu0 0
    %609 = vmatpush2.bf16.msra.mxu0 0
    %610 = vmatprep.subr.bf16.mxu0 0
    %611 = vmatpush2.bf16.msra.mxu0 0
    %612 = vmatprep.subr.bf16.mxu0 0
    %613 = vmatpush2.bf16.msra.mxu0 0
    %614 = vmatprep.subr.bf16.mxu0 0
    %615 = vmatpush2.bf16.msra.mxu0 0
    %616 = vmatprep.subr.bf16.mxu0 0
    %617 = vmatpush2.bf16.msra.mxu0 0
    %618 = vmatprep.subr.bf16.mxu0 0
    %619 = vmatpush2.bf16.msra.mxu0 0
    %620 = vmatprep.mubr.bf16.mxu0 0
    %621 = vmatmul.mubr.bf16.gmra.mxu0 %v516
    %v622 = vpop.f32.mrf.mxu0
    %v623 = vadd.f32 0.0, %v622
    %v624 = vpop.f32.mrf.mxu0
    %v625 = vpop.f32.mrf.mxu0
    %v626 = vadd.f32 0.0, %v625
    %v627 = vpop.f32.mrf.mxu0
    %628 = vmatprep.mubr.bf16.mxu0 0
    %629 = vmatmul.mubr.bf16.gmra.mxu0 %v517
    %v630 = vpop.f32.mrf.mxu0
    %v631 = vadd.f32 0.0, %v630
    %v632 = vpop.f32.mrf.mxu0
    %v633 = vpop.f32.mrf.mxu0
    %v634 = vadd.f32 0.0, %v633
    %v635 = vpop.f32.mrf.mxu0
    %636 = vmatprep.mubr.bf16.mxu0 0
    %637 = vmatmul.mubr.bf16.gmra.mxu0 %v518
    %v638 = vpop.f32.mrf.mxu0
    %v639 = vadd.f32 0.0, %v638
    %v640 = vpop.f32.mrf.mxu0
    %v641 = vpop.f32.mrf.mxu0
    %v642 = vadd.f32 0.0, %v641
    %v643 = vpop.f32.mrf.mxu0
    %644 = vmatprep.mubr.bf16.mxu0 0
    %645 = vmatmul.mubr.bf16.gmra.mxu0 %v519
    %v646 = vpop.f32.mrf.mxu0
    %v647 = vadd.f32 0.0, %v646
    %v648 = vpop.f32.mrf.mxu0
    %v649 = vpop.f32.mrf.mxu0
    %v650 = vadd.f32 0.0, %v649
    %v651 = vpop.f32.mrf.mxu0
    %652 = vmatprep.mubr.bf16.mxu0 0
    %653 = vmatmul.mubr.bf16.gmra.mxu0 %v520
    %v654 = vpop.f32.mrf.mxu0
    %v655 = vadd.f32 0.0, %v654
    %v656 = vpop.f32.mrf.mxu0
    %v657 = vpop.f32.mrf.mxu0
    %v658 = vadd.f32 0.0, %v657
    %v659 = vpop.f32.mrf.mxu0
    %660 = vmatprep.mubr.bf16.mxu0 0
    %661 = vmatmul.mubr.bf16.gmra.mxu0 %v521
    %v662 = vpop.f32.mrf.mxu0
    %v663 = vadd.f32 0.0, %v662
    %v664 = vpop.f32.mrf.mxu0
    %v665 = vpop.f32.mrf.mxu0
    %v666 = vadd.f32 0.0, %v665
    %v667 = vpop.f32.mrf.mxu0
    %668 = vmatprep.mubr.bf16.mxu0 0
    %669 = vmatmul.mubr.bf16.gmra.mxu0 %v522
    %v670 = vpop.f32.mrf.mxu0
    %v671 = vadd.f32 0.0, %v670
    %v672 = vpop.f32.mrf.mxu0
    %v673 = vpop.f32.mrf.mxu0
    %v674 = vadd.f32 0.0, %v673
    %v675 = vpop.f32.mrf.mxu0
    %676 = vmatprep.mubr.bf16.mxu0 0
    %677 = vmatmul.mubr.bf16.gmra.mxu0 %v523
    %v678 = vpop.f32.mrf.mxu0
    %v679 = vadd.f32 0.0, %v678
    %v680 = vpop.f32.mrf.mxu0
    %v681 = vpop.f32.mrf.mxu0
    %v682 = vadd.f32 0.0, %v681
    %v683 = vpop.f32.mrf.mxu0
    %684 = vdwg.mxu0
    %v685 = vpack.c.bf16 %v626, %v623
    %v686 = vpack.c.bf16 %v634, %v631
    %v687 = vpack.c.bf16 %v642, %v639
    %v688 = vpack.c.bf16 %v650, %v647
    %v689 = vpack.c.bf16 %v658, %v655
    %v690 = vpack.c.bf16 %v666, %v663
    %v691 = vpack.c.bf16 %v674, %v671
    %v692 = vpack.c.bf16 %v682, %v679
    %v693 = vld [vmem:[%s6] sm:$0x1]
    %v695 = vlaneseq
    %v696 = vshrl.u32 %v695, 7
    %v697 = vsub.s32 0, %v696
    %v698 = vrot.slane %v693, %v697
    %700 = vmatprep.subr.bf16.mxu0 0
    %701 = vmatpush1.bf16.msra.mxu0 %v692
    %702 = vmatprep.subr.bf16.mxu0 0
    %703 = vmatpush1.bf16.msra.mxu0 %v691
    %704 = vmatprep.subr.bf16.mxu0 0
    %705 = vmatpush1.bf16.msra.mxu0 %v690
    %706 = vmatprep.subr.bf16.mxu0 0
    %707 = vmatpush1.bf16.msra.mxu0 %v689
    %708 = vmatprep.subr.bf16.mxu0 0
    %709 = vmatpush1.bf16.msra.mxu0 %v688
    %710 = vmatprep.subr.bf16.mxu0 0
    %711 = vmatpush1.bf16.msra.mxu0 %v687
    %712 = vmatprep.subr.bf16.mxu0 0
    %713 = vmatpush1.bf16.msra.mxu0 %v686
    %714 = vmatprep.subr.bf16.mxu0 0
    %715 = vmatpush1.bf16.msra.mxu0 %v685
    %716 = vmatprep.subr.bf16.mxu0 0
    %717 = vmatpush2.bf16.msra.mxu0 0
    %718 = vmatprep.subr.bf16.mxu0 0
    %719 = vmatpush2.bf16.msra.mxu0 0
    %720 = vmatprep.subr.bf16.mxu0 0
    %721 = vmatpush2.bf16.msra.mxu0 0
    %722 = vmatprep.subr.bf16.mxu0 0
    %723 = vmatpush2.bf16.msra.mxu0 0
    %724 = vmatprep.subr.bf16.mxu0 0
    %725 = vmatpush2.bf16.msra.mxu0 0
    %726 = vmatprep.subr.bf16.mxu0 0
    %727 = vmatpush2.bf16.msra.mxu0 0
    %728 = vmatprep.subr.bf16.mxu0 0
    %729 = vmatpush2.bf16.msra.mxu0 0
    %730 = vmatprep.subr.bf16.mxu0 0
    %731 = vmatpush2.bf16.msra.mxu0 0
    %732 = vmatprep.mubr.bf16.mxu0 0
    %733 = vmatmul.mubr.bf16.gmra.mxu0 %v387
    %v734 = vpop.f32.mrf.mxu0
    %v735 = vadd.f32 %v698, %v734
    %v736 = vpop.f32.mrf.mxu0
    %v737 = vpop.f32.mrf.mxu0
    %v738 = vadd.f32 %v698, %v737
    %v739 = vpop.f32.mrf.mxu0
    %740 = vmatprep.mubr.bf16.mxu0 0
    %741 = vmatmul.mubr.bf16.gmra.mxu0 %v388
    %v742 = vpop.f32.mrf.mxu0
    %v743 = vadd.f32 %v698, %v742
    %v744 = vpop.f32.mrf.mxu0
    %v745 = vpop.f32.mrf.mxu0
    %v746 = vadd.f32 %v698, %v745
    %v747 = vpop.f32.mrf.mxu0
    %748 = vmatprep.mubr.bf16.mxu0 0
    %749 = vmatmul.mubr.bf16.gmra.mxu0 %v389
    %v750 = vpop.f32.mrf.mxu0
    %v751 = vadd.f32 %v698, %v750
    %v752 = vpop.f32.mrf.mxu0
    %v753 = vpop.f32.mrf.mxu0
    %v754 = vadd.f32 %v698, %v753
    %v755 = vpop.f32.mrf.mxu0
    %756 = vmatprep.mubr.bf16.mxu0 0
    %757 = vmatmul.mubr.bf16.gmra.mxu0 %v390
    %v758 = vpop.f32.mrf.mxu0
    %v759 = vadd.f32 %v698, %v758
    %v760 = vpop.f32.mrf.mxu0
    %v761 = vpop.f32.mrf.mxu0
    %v762 = vadd.f32 %v698, %v761
    %v763 = vpop.f32.mrf.mxu0
    %764 = vmatprep.mubr.bf16.mxu0 0
    %765 = vmatmul.mubr.bf16.gmra.mxu0 %v391
    %v766 = vpop.f32.mrf.mxu0
    %v767 = vadd.f32 %v698, %v766
    %v768 = vpop.f32.mrf.mxu0
    %v769 = vpop.f32.mrf.mxu0
    %v770 = vadd.f32 %v698, %v769
    %v771 = vpop.f32.mrf.mxu0
    %772 = vmatprep.mubr.bf16.mxu0 0
    %773 = vmatmul.mubr.bf16.gmra.mxu0 %v392
    %v774 = vpop.f32.mrf.mxu0
    %v775 = vadd.f32 %v698, %v774
    %v776 = vpop.f32.mrf.mxu0
    %v777 = vpop.f32.mrf.mxu0
    %v778 = vadd.f32 %v698, %v777
    %v779 = vpop.f32.mrf.mxu0
    %780 = vmatprep.mubr.bf16.mxu0 0
    %781 = vmatmul.mubr.bf16.gmra.mxu0 %v393
    %v782 = vpop.f32.mrf.mxu0
    %v783 = vadd.f32 %v698, %v782
    %v784 = vpop.f32.mrf.mxu0
    %v785 = vpop.f32.mrf.mxu0
    %v786 = vadd.f32 %v698, %v785
    %v787 = vpop.f32.mrf.mxu0
    %788 = vmatprep.mubr.bf16.mxu0 0
    %789 = vmatmul.mubr.bf16.gmra.mxu0 %v394
    %v790 = vpop.f32.mrf.mxu0
    %v791 = vadd.f32 %v698, %v790
    %v792 = vpop.f32.mrf.mxu0
    %v793 = vpop.f32.mrf.mxu0
    %v794 = vadd.f32 %v698, %v793
    %v795 = vpop.f32.mrf.mxu0
    %796 = vdwg.mxu0
    %v797 = vmax.f32 %v735, 0.0
    %v798 = vmax.f32 %v738, 0.0
    %v799 = vmax.f32 %v743, 0.0
    %v800 = vmax.f32 %v746, 0.0
    %v801 = vmax.f32 %v751, 0.0
    %v802 = vmax.f32 %v754, 0.0
    %v803 = vmax.f32 %v759, 0.0
    %v804 = vmax.f32 %v762, 0.0
    %v805 = vmax.f32 %v767, 0.0
    %v806 = vmax.f32 %v770, 0.0
    %v807 = vmax.f32 %v775, 0.0
    %v808 = vmax.f32 %v778, 0.0
    %v809 = vmax.f32 %v783, 0.0
    %v810 = vmax.f32 %v786, 0.0
    %v811 = vmax.f32 %v791, 0.0
    %v812 = vmax.f32 %v794, 0.0
    %v813 = vpack.c.bf16 %v798, %v797
    %v814 = vpack.c.bf16 %v800, %v799
    %v815 = vpack.c.bf16 %v802, %v801
    %v816 = vpack.c.bf16 %v804, %v803
    %v817 = vpack.c.bf16 %v806, %v805
    %v818 = vpack.c.bf16 %v808, %v807
    %v819 = vpack.c.bf16 %v810, %v809
    %v820 = vpack.c.bf16 %v812, %v811
    %v821 = vld [vmem:[#allocation10] sm:$0xf]
    %v822 = vld [vmem:[#allocation10 + $0x4] sm:$0xf]
    %v823 = vld [vmem:[#allocation10 + $0x8] sm:$0xf]
    %v824 = vld [vmem:[#allocation10 + $0xc] sm:$0xf]
    %v825 = vld [vmem:[#allocation10 + $0x10] sm:$0xf]
    %v826 = vld [vmem:[#allocation10 + $0x14] sm:$0xf]
    %v827 = vld [vmem:[#allocation10 + $0x18] sm:$0xf]
    %v828 = vld [vmem:[#allocation10 + $0x1c] sm:$0xf]
    %v829 = vld [vmem:[#allocation10 + $0x20] sm:$0xf]
    %v830 = vld [vmem:[#allocation10 + $0x24] sm:$0xf]
    %v831 = vld [vmem:[#allocation10 + $0x28] sm:$0xf]
    %v832 = vld [vmem:[#allocation10 + $0x2c] sm:$0xf]
    %v833 = vld [vmem:[#allocation10 + $0x30] sm:$0xf]
    %v834 = vld [vmem:[#allocation10 + $0x34] sm:$0xf]
    %v835 = vld [vmem:[#allocation10 + $0x38] sm:$0xf]
    %v836 = vld [vmem:[#allocation10 + $0x3c] sm:$0xf]
    %v853 = vunpack.c.l.b16 %v821
    %v854 = vunpack.c.l.b16 %v822
    %v855 = vunpack.c.l.b16 %v823
    %v856 = vunpack.c.l.b16 %v824
    %v857 = vunpack.c.l.b16 %v825
    %v858 = vunpack.c.l.b16 %v826
    %v859 = vunpack.c.l.b16 %v827
    %v860 = vunpack.c.l.b16 %v828
    %v861 = vunpack.c.l.b16 %v829
    %v862 = vunpack.c.l.b16 %v830
    %v863 = vunpack.c.l.b16 %v831
    %v864 = vunpack.c.l.b16 %v832
    %v865 = vunpack.c.l.b16 %v833
    %v866 = vunpack.c.l.b16 %v834
    %v867 = vunpack.c.l.b16 %v835
    %v868 = vunpack.c.l.b16 %v836
    %v869 = vpack.c.b16 %v854, %v853
    %v870 = vpack.c.b16 %v856, %v855
    %v871 = vpack.c.b16 %v858, %v857
    %v872 = vpack.c.b16 %v860, %v859
    %v873 = vpack.c.b16 %v862, %v861
    %v874 = vpack.c.b16 %v864, %v863
    %v875 = vpack.c.b16 %v866, %v865
    %v876 = vpack.c.b16 %v868, %v867
    %885 = vmatprep.subr.bf16.mxu0 0
    %886 = vmatpush1.bf16.msra.mxu0 %v876
    %887 = vmatprep.subr.bf16.mxu0 0
    %888 = vmatpush1.bf16.msra.mxu0 %v875
    %889 = vmatprep.subr.bf16.mxu0 0
    %890 = vmatpush1.bf16.msra.mxu0 %v874
    %891 = vmatprep.subr.bf16.mxu0 0
    %892 = vmatpush1.bf16.msra.mxu0 %v873
    %893 = vmatprep.subr.bf16.mxu0 0
    %894 = vmatpush1.bf16.msra.mxu0 %v872
    %895 = vmatprep.subr.bf16.mxu0 0
    %896 = vmatpush1.bf16.msra.mxu0 %v871
    %897 = vmatprep.subr.bf16.mxu0 0
    %898 = vmatpush1.bf16.msra.mxu0 %v870
    %899 = vmatprep.subr.bf16.mxu0 0
    %900 = vmatpush1.bf16.msra.mxu0 %v869
    %901 = vmatprep.subr.bf16.mxu0 0
    %902 = vmatpush2.bf16.msra.mxu0 0
    %903 = vmatprep.subr.bf16.mxu0 0
    %904 = vmatpush2.bf16.msra.mxu0 0
    %905 = vmatprep.subr.bf16.mxu0 0
    %906 = vmatpush2.bf16.msra.mxu0 0
    %907 = vmatprep.subr.bf16.mxu0 0
    %908 = vmatpush2.bf16.msra.mxu0 0
    %909 = vmatprep.subr.bf16.mxu0 0
    %910 = vmatpush2.bf16.msra.mxu0 0
    %911 = vmatprep.subr.bf16.mxu0 0
    %912 = vmatpush2.bf16.msra.mxu0 0
    %913 = vmatprep.subr.bf16.mxu0 0
    %914 = vmatpush2.bf16.msra.mxu0 0
    %915 = vmatprep.subr.bf16.mxu0 0
    %916 = vmatpush2.bf16.msra.mxu0 0
    %917 = vmatprep.mubr.bf16.mxu0 0
    %918 = vmatmul.mubr.bf16.gmra.mxu0 %v813
    %v919 = vpop.f32.mrf.mxu0
    %v920 = vadd.f32 0.0, %v919
    %v921 = vpop.f32.mrf.mxu0
    %v922 = vpop.f32.mrf.mxu0
    %v923 = vadd.f32 0.0, %v922
    %v924 = vpop.f32.mrf.mxu0
    %925 = vmatprep.mubr.bf16.mxu0 0
    %926 = vmatmul.mubr.bf16.gmra.mxu0 %v814
    %v927 = vpop.f32.mrf.mxu0
    %v928 = vadd.f32 0.0, %v927
    %v929 = vpop.f32.mrf.mxu0
    %v930 = vpop.f32.mrf.mxu0
    %v931 = vadd.f32 0.0, %v930
    %v932 = vpop.f32.mrf.mxu0
    %933 = vmatprep.mubr.bf16.mxu0 0
    %934 = vmatmul.mubr.bf16.gmra.mxu0 %v815
    %v935 = vpop.f32.mrf.mxu0
    %v936 = vadd.f32 0.0, %v935
    %v937 = vpop.f32.mrf.mxu0
    %v938 = vpop.f32.mrf.mxu0
    %v939 = vadd.f32 0.0, %v938
    %v940 = vpop.f32.mrf.mxu0
    %941 = vmatprep.mubr.bf16.mxu0 0
    %942 = vmatmul.mubr.bf16.gmra.mxu0 %v816
    %v943 = vpop.f32.mrf.mxu0
    %v944 = vadd.f32 0.0, %v943
    %v945 = vpop.f32.mrf.mxu0
    %v946 = vpop.f32.mrf.mxu0
    %v947 = vadd.f32 0.0, %v946
    %v948 = vpop.f32.mrf.mxu0
    %949 = vmatprep.mubr.bf16.mxu0 0
    %950 = vmatmul.mubr.bf16.gmra.mxu0 %v817
    %v951 = vpop.f32.mrf.mxu0
    %v952 = vadd.f32 0.0, %v951
    %v953 = vpop.f32.mrf.mxu0
    %v954 = vpop.f32.mrf.mxu0
    %v955 = vadd.f32 0.0, %v954
    %v956 = vpop.f32.mrf.mxu0
    %957 = vmatprep.mubr.bf16.mxu0 0
    %958 = vmatmul.mubr.bf16.gmra.mxu0 %v818
    %v959 = vpop.f32.mrf.mxu0
    %v960 = vadd.f32 0.0, %v959
    %v961 = vpop.f32.mrf.mxu0
    %v962 = vpop.f32.mrf.mxu0
    %v963 = vadd.f32 0.0, %v962
    %v964 = vpop.f32.mrf.mxu0
    %965 = vmatprep.mubr.bf16.mxu0 0
    %966 = vmatmul.mubr.bf16.gmra.mxu0 %v819
    %v967 = vpop.f32.mrf.mxu0
    %v968 = vadd.f32 0.0, %v967
    %v969 = vpop.f32.mrf.mxu0
    %v970 = vpop.f32.mrf.mxu0
    %v971 = vadd.f32 0.0, %v970
    %v972 = vpop.f32.mrf.mxu0
    %973 = vmatprep.mubr.bf16.mxu0 0
    %974 = vmatmul.mubr.bf16.gmra.mxu0 %v820
    %v975 = vpop.f32.mrf.mxu0
    %v976 = vadd.f32 0.0, %v975
    %v977 = vpop.f32.mrf.mxu0
    %v978 = vpop.f32.mrf.mxu0
    %v979 = vadd.f32 0.0, %v978
    %v980 = vpop.f32.mrf.mxu0
    %981 = vdwg.mxu0
    %v982 = vpack.c.bf16 %v923, %v920
    %v983 = vpack.c.bf16 %v931, %v928
    %v984 = vpack.c.bf16 %v939, %v936
    %v985 = vpack.c.bf16 %v947, %v944
    %v986 = vpack.c.bf16 %v955, %v952
    %v987 = vpack.c.bf16 %v963, %v960
    %v988 = vpack.c.bf16 %v971, %v968
    %v989 = vpack.c.bf16 %v979, %v976
    %v990 = vld [vmem:[%s7] sm:$0x1]
    %v992 = vlaneseq
    %v993 = vshrl.u32 %v992, 7
    %v994 = vsub.s32 0, %v993
    %v995 = vrot.slane %v990, %v994
    %997 = vmatprep.subr.bf16.mxu0 0
    %998 = vmatpush1.bf16.msra.mxu0 %v989
    %999 = vmatprep.subr.bf16.mxu0 0
    %1000 = vmatpush1.bf16.msra.mxu0 %v988
    %1001 = vmatprep.subr.bf16.mxu0 0
    %1002 = vmatpush1.bf16.msra.mxu0 %v987
    %1003 = vmatprep.subr.bf16.mxu0 0
    %1004 = vmatpush1.bf16.msra.mxu0 %v986
    %1005 = vmatprep.subr.bf16.mxu0 0
    %1006 = vmatpush1.bf16.msra.mxu0 %v985
    %1007 = vmatprep.subr.bf16.mxu0 0
    %1008 = vmatpush1.bf16.msra.mxu0 %v984
    %1009 = vmatprep.subr.bf16.mxu0 0
    %1010 = vmatpush1.bf16.msra.mxu0 %v983
    %1011 = vmatprep.subr.bf16.mxu0 0
    %1012 = vmatpush1.bf16.msra.mxu0 %v982
    %1013 = vmatprep.subr.bf16.mxu0 0
    %1014 = vmatpush2.bf16.msra.mxu0 0
    %1015 = vmatprep.subr.bf16.mxu0 0
    %1016 = vmatpush2.bf16.msra.mxu0 0
    %1017 = vmatprep.subr.bf16.mxu0 0
    %1018 = vmatpush2.bf16.msra.mxu0 0
    %1019 = vmatprep.subr.bf16.mxu0 0
    %1020 = vmatpush2.bf16.msra.mxu0 0
    %1021 = vmatprep.subr.bf16.mxu0 0
    %1022 = vmatpush2.bf16.msra.mxu0 0
    %1023 = vmatprep.subr.bf16.mxu0 0
    %1024 = vmatpush2.bf16.msra.mxu0 0
    %1025 = vmatprep.subr.bf16.mxu0 0
    %1026 = vmatpush2.bf16.msra.mxu0 0
    %1027 = vmatprep.subr.bf16.mxu0 0
    %1028 = vmatpush2.bf16.msra.mxu0 0
    %1029 = vmatprep.mubr.bf16.mxu0 0
    %1030 = vmatmul.mubr.bf16.gmra.mxu0 %v387
    %v1031 = vpop.f32.mrf.mxu0
    %v1032 = vadd.f32 %v995, %v1031
    %v1033 = vpop.f32.mrf.mxu0
    %v1034 = vpop.f32.mrf.mxu0
    %v1035 = vadd.f32 %v995, %v1034
    %v1036 = vpop.f32.mrf.mxu0
    %1037 = vmatprep.mubr.bf16.mxu0 0
    %1038 = vmatmul.mubr.bf16.gmra.mxu0 %v388
    %v1039 = vpop.f32.mrf.mxu0
    %v1040 = vadd.f32 %v995, %v1039
    %v1041 = vpop.f32.mrf.mxu0
    %v1042 = vpop.f32.mrf.mxu0
    %v1043 = vadd.f32 %v995, %v1042
    %v1044 = vpop.f32.mrf.mxu0
    %1045 = vmatprep.mubr.bf16.mxu0 0
    %1046 = vmatmul.mubr.bf16.gmra.mxu0 %v389
    %v1047 = vpop.f32.mrf.mxu0
    %v1048 = vadd.f32 %v995, %v1047
    %v1049 = vpop.f32.mrf.mxu0
    %v1050 = vpop.f32.mrf.mxu0
    %v1051 = vadd.f32 %v995, %v1050
    %v1052 = vpop.f32.mrf.mxu0
    %1053 = vmatprep.mubr.bf16.mxu0 0
    %1054 = vmatmul.mubr.bf16.gmra.mxu0 %v390
    %v1055 = vpop.f32.mrf.mxu0
    %v1056 = vadd.f32 %v995, %v1055
    %v1057 = vpop.f32.mrf.mxu0
    %v1058 = vpop.f32.mrf.mxu0
    %v1059 = vadd.f32 %v995, %v1058
    %v1060 = vpop.f32.mrf.mxu0
    %1061 = vmatprep.mubr.bf16.mxu0 0
    %1062 = vmatmul.mubr.bf16.gmra.mxu0 %v391
    %v1063 = vpop.f32.mrf.mxu0
    %v1064 = vadd.f32 %v995, %v1063
    %v1065 = vpop.f32.mrf.mxu0
    %v1066 = vpop.f32.mrf.mxu0
    %v1067 = vadd.f32 %v995, %v1066
    %v1068 = vpop.f32.mrf.mxu0
    %1069 = vmatprep.mubr.bf16.mxu0 0
    %1070 = vmatmul.mubr.bf16.gmra.mxu0 %v392
    %v1071 = vpop.f32.mrf.mxu0
    %v1072 = vadd.f32 %v995, %v1071
    %v1073 = vpop.f32.mrf.mxu0
    %v1074 = vpop.f32.mrf.mxu0
    %v1075 = vadd.f32 %v995, %v1074
    %v1076 = vpop.f32.mrf.mxu0
    %1077 = vmatprep.mubr.bf16.mxu0 0
    %1078 = vmatmul.mubr.bf16.gmra.mxu0 %v393
    %v1079 = vpop.f32.mrf.mxu0
    %v1080 = vadd.f32 %v995, %v1079
    %v1081 = vpop.f32.mrf.mxu0
    %v1082 = vpop.f32.mrf.mxu0
    %v1083 = vadd.f32 %v995, %v1082
    %v1084 = vpop.f32.mrf.mxu0
    %1085 = vmatprep.mubr.bf16.mxu0 0
    %1086 = vmatmul.mubr.bf16.gmra.mxu0 %v394
    %v1087 = vpop.f32.mrf.mxu0
    %v1088 = vadd.f32 %v995, %v1087
    %v1089 = vpop.f32.mrf.mxu0
    %v1090 = vpop.f32.mrf.mxu0
    %v1091 = vadd.f32 %v995, %v1090
    %v1092 = vpop.f32.mrf.mxu0
    %1093 = vdwg.mxu0
    %1094 = vst [vmem:[#allocation11] sm:$0xff] %v1032
    %1095 = vst [vmem:[#allocation11 + $0x8] sm:$0xff] %v1035
    %1096 = vst [vmem:[#allocation11 + $0x10] sm:$0xff] %v1040
    %1097 = vst [vmem:[#allocation11 + $0x18] sm:$0xff] %v1043
    %1098 = vst [vmem:[#allocation11 + $0x20] sm:$0xff] %v1048
    %1099 = vst [vmem:[#allocation11 + $0x28] sm:$0xff] %v1051
    %1100 = vst [vmem:[#allocation11 + $0x30] sm:$0xff] %v1056
    %1101 = vst [vmem:[#allocation11 + $0x38] sm:$0xff] %v1059
    %1102 = vst [vmem:[#allocation11 + $0x40] sm:$0xff] %v1064
    %1103 = vst [vmem:[#allocation11 + $0x48] sm:$0xff] %v1067
    %1104 = vst [vmem:[#allocation11 + $0x50] sm:$0xff] %v1072
    %1105 = vst [vmem:[#allocation11 + $0x58] sm:$0xff] %v1075
    %1106 = vst [vmem:[#allocation11 + $0x60] sm:$0xff] %v1080
    %1107 = vst [vmem:[#allocation11 + $0x68] sm:$0xff] %v1083
    %1108 = vst [vmem:[#allocation11 + $0x70] sm:$0xff] %v1088
    %1109 = vst [vmem:[#allocation11 + $0x78] sm:$0xff] %v1091
    // Predicated region
    $region54: #{tpu_custom_call.1} parent=1 // pred_check
      _
    $region55: #{tpu_custom_call.1} parent=1 // pred_check_branch
      %1111 = sbr.rel (0) target = $region57
    $region56: #{tpu_custom_call.1} parent=1 // pred_region
      %s1113 = ssub.s32 2048, 2048
      %1114 = vsyncadd [#allocation4], %s1113
      %s1115 = sshll.u32 [#allocation11], 4
      %s1116 = int_to_ptr.vmem [resolvable:$true] %s1115
      %1121 = dma.vmem_to_hbm [thread:$0]  %s1116, 2048, %s8, [#allocation4], 128, 128, 8
    $region57: #{tpu_custom_call.1} parent=1 // pred_fallthru
      _
    // Predicated region
    $region58: #{tpu_custom_call.1} parent=1 // pred_check
      _
    $region59: #{tpu_custom_call.1} parent=1 // pred_check_branch
      %1123 = sbr.rel (0) target = $region61
    $region60: #{tpu_custom_call.1} parent=1 // pred_region
      %1124 = dma.done [#allocation4], 2048
    $region61: #{tpu_custom_call.1} parent=1 // pred_fallthru
      _
    %1125 = vsyncpa [#allocation3], 1
    %1126 = vsyncpa [#allocation6], 1
    %1127 = vsyncpa [#allocation9], 1
    %1128 = vsyncpa [#allocation4], 1

</llo_original>
